<compile_context>
chip_gen: v7x
topology: tpu7x:2x2x1
jax: 0.10.0
libtpu: 0.0.40
codegen_flags: <defaults>
</compile_context>

<pallas_src>
import math

import jax
import jax.numpy as jnp
from jax.experimental import pallas as pl
from jax.experimental.pallas import tpu as pltpu


# ----------------------------------------------------------------------------
# Kernels
# ----------------------------------------------------------------------------

def _gcn_kernel(inp_ref, adj_ref, w_ref, b_ref, out_ref):
    """Whole-sequence path: one batch tile per grid step.

    inp_ref : (b_tile * ml, hid)   f32  (batch folded into matmul rows)
    adj_ref : (b_tile, ml, ml)     f32
    w_ref   : (hid, hid2)          f32
    b_ref   : (1, hid2)            f32
    out_ref : (b_tile, ml, hid2)   f32  (hid2 = 128 -> lane-dense stores)
    """
    b_tile, ml, _ = adj_ref.shape
    hid2 = w_ref.shape[1]

    # Projection: one (b_tile*ml, hid) @ (hid, hid2) MXU matmul.  bf16
    # operands (in-kernel cast -> HBM traffic stays 1x f32), f32 accumulation,
    # f32 bias epilogue.
    h = jnp.dot(inp_ref[...].astype(jnp.bfloat16),
                w_ref[...].astype(jnp.bfloat16),
                preferred_element_type=jnp.float32)
    h = h + b_ref[...]

    # Neighborhood aggregation: one batched MXU matmul over the b_tile batch
    # dim and a single lane-dense store (no per-sample Python loop).
    h_bf = h.reshape(b_tile, ml, hid2).astype(jnp.bfloat16)
    agg = jnp.einsum("bij,bjk->bik",
                     adj_ref[...].astype(jnp.bfloat16), h_bf,
                     preferred_element_type=jnp.float32)
    out_ref[...] = jnp.maximum(agg, 0.0).astype(out_ref.dtype)   # ReLU


def _gcn_rowtiled_kernel(inp_ref, adj_ref, w_ref, b_ref, out_ref, h_ref):
    """Large-ml path: grid = (batch, ml // tm); adjacency/output row-tiled.

    inp_ref : (ml, hid)      f32  (resident across the row steps of one sample)
    adj_ref : (1, tm, ml)    f32  row stripe of the adjacency matrix
    w_ref   : (hid, hid2)    f32
    b_ref   : (1, hid2)      f32
    out_ref : (1, tm, hid2)  f32
    h_ref   : (ml, hid2)     bf16 VMEM scratch holding the projected features
    """
    @pl.when(pl.program_id(1) == 0)
    def _():
        h = jnp.dot(inp_ref[...].astype(jnp.bfloat16),
                    w_ref[...].astype(jnp.bfloat16),
                    preferred_element_type=jnp.float32)
        h_ref[...] = (h + b_ref[...]).astype(h_ref.dtype)

    agg = jnp.dot(adj_ref[0].astype(jnp.bfloat16), h_ref[...],
                  preferred_element_type=jnp.float32)
    out_ref[0] = jnp.maximum(agg, 0.0).astype(out_ref.dtype)


# ----------------------------------------------------------------------------
# Sizing helpers (VMEM accounting includes (8,128) layout padding)
# ----------------------------------------------------------------------------

def _round_up(x, m):
    return ((x + m - 1) // m) * m


def _block_vmem_bytes(b_tile, ml, hid, hid2):
    """Padded, double-buffered VMEM footprint of the whole-sequence path."""
    inp = _round_up(b_tile * ml, 8) * _round_up(hid, 128) * 4
    adj = b_tile * _round_up(ml, 8) * _round_up(ml, 128) * 4
    out = b_tile * _round_up(ml, 8) * _round_up(hid2, 128) * 4
    w = _round_up(hid, 8) * _round_up(hid2, 128) * 4
    bias = 8 * _round_up(hid2, 128) * 4
    dbuf = 2 * (inp + adj + out + w + bias)           # double buffering
    # In-kernel temporaries: bf16 copies of inp/adj/W, h in f32 + bf16.
    tmp = (inp + adj + w) // 2 \
        + _round_up(b_tile * ml, 8) * _round_up(hid2, 128) * 6
    return dbuf + tmp


def _rowtile_vmem_bytes(tm, ml, hid, hid2):
    """Padded, double-buffered VMEM footprint of the row-tiled path (b_tile=1)."""
    inp = _round_up(ml, 8) * _round_up(hid, 128) * 4
    adj = _round_up(tm, 8) * _round_up(ml, 128) * 4
    out = _round_up(tm, 8) * _round_up(hid2, 128) * 4
    w = _round_up(hid, 8) * _round_up(hid2, 128) * 4
    bias = 8 * _round_up(hid2, 128) * 4
    dbuf = 2 * (inp + adj + out + w + bias)
    h_scr = _round_up(ml, 16) * _round_up(hid2, 128) * 2      # bf16 scratch
    tmp = (inp + adj + w) // 2 + _round_up(ml, 8) * _round_up(hid2, 128) * 4
    return dbuf + h_scr + tmp


def _tpu_vmem_info():
    """(vmem_capacity_bytes, is_v7x) with conservative fallbacks."""
    kind = ""
    try:
        kind = jax.devices()[0].device_kind.lower()
    except Exception:
        pass
    is_v7x = "v7" in kind
    vmem_cap = (64 << 20) if is_v7x else (128 << 20)
    try:
        info = pltpu.get_tpu_info()
        cap = getattr(info, "vmem_capacity_bytes", None)
        if cap:
            vmem_cap = int(cap)
    except Exception:
        pass
    return vmem_cap, is_v7x


def _pick_b_tile(bs, ml, hid, hid2, *, budget_bytes, reserve_two_steps):
    """Largest batch tile whose padded double-buffered blocks fit the budget.

    Only v7x (2 TensorCores) reserves >=2 grid steps so the 'parallel' batch
    axis can be split across cores; on single-TC v5e/v6e a second step is pure
    pipeline overhead and halves the projection matmul's row count.
    """
    max_bt = bs // 2 if (reserve_two_steps and bs >= 2) else bs
    best = 1
    for bt in range(1, max_bt + 1):
        if bs % bt == 0 and _block_vmem_bytes(bt, ml, hid, hid2) <= budget_bytes:
            best = bt
    return best


def _pick_row_tile(ml, hid, hid2, budget_bytes):
    """Largest row tile (multiple of 8, divides ml) fitting the budget."""
    best = None
    for tm in range(8, ml + 1, 8):
        if ml % tm == 0 and _rowtile_vmem_bytes(tm, ml, hid, hid2) <= budget_bytes:
            best = tm
    return best


# ----------------------------------------------------------------------------
# Wrapper
# ----------------------------------------------------------------------------

def gcn_forward(inp, adj, W, b, *, b_tile=None):
    """inp: [bs, ml, hid], adj: [bs, ml, ml], W: [hid, hid2], b: [hid2]."""
    bs, ml, hid = inp.shape
    hid2 = W.shape[1]
    assert adj.shape == (bs, ml, ml)

    vmem_cap, is_v7x = _tpu_vmem_info()
    # Per-generation block budget; vmem_limit_bytes capped at 48 MiB (safe on
    # v7x's 64 MiB per-TC VMEM, trivially safe on 128 MiB v5e/v6e).
    budget = min(int(vmem_cap * 0.35), 40 << 20)
    limit_cap = min(48 << 20, max(vmem_cap - (12 << 20), 16 << 20))

    # Inputs stay f32 in HBM; all bf16 casting happens inside the kernel.
    inp2d = inp.astype(jnp.float32).reshape(bs * ml, hid)
    adj_f = adj.astype(jnp.float32)                     # matches adj.float()
    w_f = W.astype(jnp.float32)
    b2d = b.reshape(1, hid2).astype(jnp.float32)

    fits_single = _block_vmem_bytes(1, ml, hid, hid2) <= budget
    tm = None if fits_single else _pick_row_tile(ml, hid, hid2, budget)

    if fits_single or tm is None:
        # ------------------------------------------------------------------
        # Whole-sequence path (used for the test shapes).
        # ------------------------------------------------------------------
        # TODO(synk): when even a (8, ml) adjacency row-stripe overflows the
        # budget (tm is None at extreme ml), also tile the ml contraction dim.
        if b_tile is None:
            b_tile = (_pick_b_tile(bs, ml, hid, hid2, budget_bytes=budget,
                                   reserve_two_steps=is_v7x)
                      if fits_single else 1)
        assert bs % b_tile == 0
        kernel = _gcn_kernel
        grid_spec = pltpu.PrefetchScalarGridSpec(
            num_scalar_prefetch=0,
            grid=(bs // b_tile,),
            in_specs=[
                pl.BlockSpec((b_tile * ml, hid), lambda i: (i, 0)),
                pl.BlockSpec((b_tile, ml, ml), lambda i: (i, 0, 0)),
                pl.BlockSpec((hid, hid2), lambda i: (0, 0)),
                pl.BlockSpec((1, hid2), lambda i: (0, 0)),
            ],
            out_specs=pl.BlockSpec((b_tile, ml, hid2), lambda i: (i, 0, 0)),
        )
        dims = ("parallel",)
        vmem_need = _block_vmem_bytes(b_tile, ml, hid, hid2)
    else:
        # ------------------------------------------------------------------
        # Large-ml path: row-tile adj/out over ml, cache h in VMEM scratch.
        # ------------------------------------------------------------------
        kernel = _gcn_rowtiled_kernel
        grid_spec = pltpu.PrefetchScalarGridSpec(
            num_scalar_prefetch=0,
            grid=(bs, ml // tm),
            in_specs=[
                pl.BlockSpec((ml, hid), lambda i, r: (i, 0)),
                pl.BlockSpec((1, tm, ml), lambda i, r: (i, r, 0)),
                pl.BlockSpec((hid, hid2), lambda i, r: (0, 0)),
                pl.BlockSpec((1, hid2), lambda i, r: (0, 0)),
            ],
            out_specs=pl.BlockSpec((1, tm, hid2), lambda i, r: (i, r, 0)),
            scratch_shapes=[pltpu.VMEM((ml, hid2), jnp.bfloat16)],
        )
        dims = ("parallel", "arbitrary")
        vmem_need = _rowtile_vmem_bytes(tm, ml, hid, hid2)

    cp_kwargs = dict(dimension_semantics=dims)
    if vmem_need + (2 << 20) > (16 << 20):     # above the smallest default scope
        cp_kwargs["vmem_limit_bytes"] = int(min(vmem_need + (8 << 20), limit_cap))

    return pl.pallas_call(
        kernel,
        out_shape=jax.ShapeDtypeStruct((bs, ml, hid2), jnp.float32),
        grid_spec=grid_spec,
        compiler_params=pltpu.CompilerParams(**cp_kwargs),
    )(inp2d, adj_f, w_f, b2d)


# ----------------------------------------------------------------------------
# Test
# ----------------------------------------------------------------------------

if __name__ == "__main__":
    # Shapes consistent with the module: default hid_size=256 -> hid2=128
    # (lane-dense output), modest batch/sequence sizes.
    bs, ml, hid = 4, 16, 256
    hid2 = hid // 2

    key = jax.random.PRNGKey(0)
    k_inp, k_adj, k_w, k_b = jax.random.split(key, 4)

    inp = jax.random.normal(k_inp, (bs, ml, hid), dtype=jnp.float32)
    # binary adjacency (matches adj.float() semantics; exact in bf16)
    adj = (jax.random.uniform(k_adj, (bs, ml, ml)) > 0.5).astype(jnp.float32)

    # Same init distribution as the torch module: uniform(-stdv, stdv),
    # stdv = 1/sqrt(hid//2).
    stdv = 1.0 / math.sqrt(hid2)
    W = jax.random.uniform(k_w, (hid, hid2), minval=-stdv, maxval=stdv,
                           dtype=jnp.float32)
    b = jax.random.uniform(k_b, (hid2,), minval=-stdv, maxval=stdv,
                           dtype=jnp.float32)

    out = jax.block_until_ready(gcn_forward(inp, adj, W, b))

    # Pure-JAX reference applying the same bf16 rounding as the kernel
    # (operands AND the projected intermediate h), math in f32.
    inp_r = inp.astype(jnp.bfloat16).astype(jnp.float32)
    adj_r = adj.astype(jnp.bfloat16).astype(jnp.float32)
    w_r = W.astype(jnp.bfloat16).astype(jnp.float32)
    h_r = jnp.matmul(inp_r, w_r) + b
    h_r = h_r.astype(jnp.bfloat16).astype(jnp.float32)
    ref = jnp.maximum(jnp.matmul(adj_r, h_r), 0.0)

    assert out.shape == (bs, ml, hid2)
    assert jnp.allclose(out, ref, atol=2e-2, rtol=2e-2), \
        float(jnp.max(jnp.abs(out - ref)))

    print("KERNEL_OK")
</pallas_src>

<mosaic_0001>
module attributes {stable_mosaic.version = 11 : i64} {
  func.func @_gcn_kernel(%arg0: i32, %arg1: memref<64x256xf32, #tpu.memory_space<vmem>>, %arg2: memref<4x16x16xf32, #tpu.memory_space<vmem>>, %arg3: memref<256x128xf32, #tpu.memory_space<vmem>>, %arg4: memref<1x128xf32, #tpu.memory_space<vmem>>, %arg5: memref<4x16x128xf32, #tpu.memory_space<vmem>>) attributes {dimension_semantics = [#tpu.dimension_semantics<parallel>], iteration_bounds = array<i64: 1>, scalar_prefetch = 0 : i64, scratch_operands = 0 : i64, tpu.core_type = #tpu.core_type<tc>, window_params = [{transform_indices = @transform_0, window_bounds = array<i64: 64, 256>}, {transform_indices = @transform_1, window_bounds = array<i64: 4, 16, 16>}, {pipeline_mode = #tpu.pipeline_mode<synchronous>, transform_indices = @transform_2, window_bounds = array<i64: 256, 128>}, {pipeline_mode = #tpu.pipeline_mode<synchronous>, transform_indices = @transform_3, window_bounds = array<i64: 1, 128>}, {transform_indices = @transform_4, window_bounds = array<i64: 4, 16, 128>}]} {
    %c0 = arith.constant 0 : index
    %c0_0 = arith.constant 0 : index
    %0 = vector.load %arg1[%c0, %c0_0] : memref<64x256xf32, #tpu.memory_space<vmem>>, vector<64x256xf32>
    %1 = arith.truncf %0 : vector<64x256xf32> to vector<64x256xbf16>
    %c0_1 = arith.constant 0 : index
    %c0_2 = arith.constant 0 : index
    %2 = vector.load %arg3[%c0_1, %c0_2] : memref<256x128xf32, #tpu.memory_space<vmem>>, vector<256x128xf32>
    %3 = arith.truncf %2 : vector<256x128xf32> to vector<256x128xbf16>
    %cst = arith.constant dense<0.000000e+00> : vector<64x128xf32>
    %4 = tpu.matmul %1, %3, %cst {dimension_numbers = #tpu.dot_dimension_numbers<[1], [0], [0], [1], [0, 0, 1, 1], [], []>} : vector<64x256xbf16>, vector<256x128xbf16>, vector<64x128xf32> -> vector<64x128xf32>
    %c0_3 = arith.constant 0 : index
    %c0_4 = arith.constant 0 : index
    %5 = vector.load %arg4[%c0_3, %c0_4] : memref<1x128xf32, #tpu.memory_space<vmem>>, vector<1x128xf32>
    %6 = vector.broadcast %5 : vector<1x128xf32> to vector<64x128xf32>
    %7 = arith.addf %4, %6 : vector<64x128xf32>
    %8 = vector.shape_cast %7 : vector<64x128xf32> to vector<4x16x128xf32>
    %9 = arith.truncf %8 : vector<4x16x128xf32> to vector<4x16x128xbf16>
    %c0_5 = arith.constant 0 : index
    %c0_6 = arith.constant 0 : index
    %c0_7 = arith.constant 0 : index
    %10 = vector.load %arg2[%c0_5, %c0_6, %c0_7] : memref<4x16x16xf32, #tpu.memory_space<vmem>>, vector<4x16x16xf32>
    %11 = arith.truncf %10 : vector<4x16x16xf32> to vector<4x16x16xbf16>
    "tpu.trace_start"() <{level = 10 : i32, message = "bij,bjk->bik"}> : () -> ()
    %cst_8 = arith.constant dense<0.000000e+00> : vector<4x16x128xf32>
    %12 = tpu.matmul %11, %9, %cst_8 {dimension_numbers = #tpu.dot_dimension_numbers<[2], [1], [1], [2], [0, 0, 0, 1, 1, 2], [0], [0]>} : vector<4x16x16xbf16>, vector<4x16x128xbf16>, vector<4x16x128xf32> -> vector<4x16x128xf32>
    "tpu.trace_stop"() : () -> ()
    %cst_9 = arith.constant 0.000000e+00 : f32
    %13 = vector.broadcast %cst_9 : f32 to vector<4x16x128xf32>
    %14 = arith.maximumf %12, %13 : vector<4x16x128xf32>
    %c0_10 = arith.constant 0 : index
    %c0_11 = arith.constant 0 : index
    %c0_12 = arith.constant 0 : index
    %15 = vector.load %arg5[%c0_10, %c0_11, %c0_12] : memref<4x16x128xf32, #tpu.memory_space<vmem>>, vector<4x16x128xf32>
    tpu.vector_store %arg5[%c0_10, %c0_11, %c0_12], %14 {strides = array<i32>} : memref<4x16x128xf32, #tpu.memory_space<vmem>>, vector<4x16x128xf32>,
    return
  }
  func.func @transform_0(%arg0: i32) -> (i32, i32) {
    %c0_i32 = arith.constant 0 : i32
    %c0_i32_0 = arith.constant 0 : i32
    return %arg0, %c0_i32 : i32, i32
  }
  func.func @transform_1(%arg0: i32) -> (i32, i32, i32) {
    %c0_i32 = arith.constant 0 : i32
    %c0_i32_0 = arith.constant 0 : i32
    %c0_i32_1 = arith.constant 0 : i32
    return %arg0, %c0_i32, %c0_i32_0 : i32, i32, i32
  }
  func.func @transform_2(%arg0: i32) -> (i32, i32) {
    %c0_i32 = arith.constant 0 : i32
    %c0_i32_0 = arith.constant 0 : i32
    %c0_i32_1 = arith.constant 0 : i32
    return %c0_i32, %c0_i32_0 : i32, i32
  }
  func.func @transform_3(%arg0: i32) -> (i32, i32) {
    %c0_i32 = arith.constant 0 : i32
    %c0_i32_0 = arith.constant 0 : i32
    %c0_i32_1 = arith.constant 0 : i32
    return %c0_i32, %c0_i32_0 : i32, i32
  }
  func.func @transform_4(%arg0: i32) -> (i32, i32, i32) {
    %c0_i32 = arith.constant 0 : i32
    %c0_i32_0 = arith.constant 0 : i32
    %c0_i32_1 = arith.constant 0 : i32
    return %arg0, %c0_i32, %c0_i32_0 : i32, i32, i32
  }
}

</mosaic_0001>

<llo_original>
// kernel: tpu_custom_call.1
$region0: #{tpu_custom_call.1}
  #allocation0 [shape = 'u32[]', space=smem, size = 0x4, offset = 0x4, fixed_abs, tag = 'smem constant byte address 0x4 - core index']
  #allocation1 [shape = 'u32[144,128]{1,0:T(1,128)}', space=vmem, size = 0x12000, scoped, tag = 'internal scratch']
  %s0 = inlined_call_operand.hbm [shape: f32[64,256], index: 0, kind: input, shape index: {}]
  %s1 = inlined_call_operand.hbm [shape: f32[4,16,16], index: 1, kind: input, shape index: {}]
  %s2 = inlined_call_operand.hbm [shape: f32[256,128], index: 2, kind: input, shape index: {}]
  %s3 = inlined_call_operand.vmem [shape: f32[1,128], index: 3, kind: input, shape index: {}]
  %s4 = inlined_call_operand.hbm [shape: f32[4,16,128], index: 4, kind: output, shape index: {}]
  %s5 = sld [smem:[#allocation0]]
  $region38: #{tpu_custom_call.1} parent=0
    _
  %s7 = ssub.s32 1, %s5
  %s8 = scalar_select 0, %s7, %s5
  $region1: #{tpu_custom_call.1} parent=0
    #allocation2 [shape = 'u8[65536]{0}', space=vmem, size = 0x10000, scoped, tag = 'input window, operand 0, single buffered']
    #allocation3 [shape = 's32[1]{0}', space=sflag, size = 0x4, scoped, tag = 'scoped memory for tpu_custom_call.1']
    #allocation4 [shape = 's32[1]{0}', space=sflag, size = 0x4, scoped, tag = 'scoped memory for tpu_custom_call.1']
    #allocation5 [shape = 'u8[32768]{0}', space=vmem, size = 0x8000, scoped, tag = 'input window, operand 1, single buffered']
    #allocation6 [shape = 's32[1]{0}', space=sflag, size = 0x4, scoped, tag = 'scoped memory for tpu_custom_call.1']
    #allocation7 [shape = 'u8[131072]{0}', space=vmem, size = 0x20000, scoped, tag = 'input window, operand 2, single buffered']
    #allocation8 [shape = 'u8[32768]{0}', space=vmem, size = 0x8000, scoped, tag = 'output window, operand 0, single buffered']
    %9 = vsyncpa [#allocation3], 0
    %10 = vsyncpa [#allocation6], 0
    %11 = vsyncpa [#allocation4], 0
    // Predicated region
    $region2: #{tpu_custom_call.1} parent=1 // pred_check
      _
    $region3: #{tpu_custom_call.1} parent=1 // pred_check_branch
      %13 = sbr.rel (0) target = $region5
    $region4: #{tpu_custom_call.1} parent=1 // pred_region
      %s15 = ssub.s32 2048, 2048
      %16 = vsyncadd [#allocation3], %s15
      %s17 = sshll.u32 [#allocation2], 4
      %s18 = int_to_ptr.vmem [resolvable:$true] %s17
      %23 = dma.hbm_to_vmem [thread:$0]  %s0, 2048, %s18, [#allocation3], 256, 256, 16
    $region5: #{tpu_custom_call.1} parent=1 // pred_fallthru
      _
    // Predicated region
    $region6: #{tpu_custom_call.1} parent=1 // pred_check
      _
    $region7: #{tpu_custom_call.1} parent=1 // pred_check_branch
      %25 = sbr.rel (0) target = $region9
    $region8: #{tpu_custom_call.1} parent=1 // pred_region
      %s27 = ssub.s32 1024, 1024
      %28 = vsyncadd [#allocation6], %s27
      %s29 = sshll.u32 [#allocation5], 4
      %s30 = int_to_ptr.vmem [resolvable:$true] %s29
      %35 = dma.hbm_to_vmem [thread:$0]  %s1, 1024, %s30, [#allocation6], 128, 128, 8
    $region9: #{tpu_custom_call.1} parent=1 // pred_fallthru
      _
    // Predicated region
    $region10: #{tpu_custom_call.1} parent=1 // pred_check
      _
    $region11: #{tpu_custom_call.1} parent=1 // pred_check_branch
      %37 = sbr.rel (0) target = $region13
    $region12: #{tpu_custom_call.1} parent=1 // pred_region
      %s39 = ssub.s32 4096, 4096
      %40 = vsyncadd [#allocation6], %s39
      %s41 = sshll.u32 [#allocation7], 4
      %s42 = int_to_ptr.vmem [resolvable:$true] %s41
      %47 = dma.hbm_to_vmem [thread:$0]  %s2, 4096, %s42, [#allocation6], 128, 128, 8
    $region13: #{tpu_custom_call.1} parent=1 // pred_fallthru
      _
    // Predicated region
    $region14: #{tpu_custom_call.1} parent=1 // pred_check
      _
    $region15: #{tpu_custom_call.1} parent=1 // pred_check_branch
      %49 = sbr.rel (0) target = $region17
    $region16: #{tpu_custom_call.1} parent=1 // pred_region
      _
    $region17: #{tpu_custom_call.1} parent=1 // pred_fallthru
      _
    // Predicated region
    $region18: #{tpu_custom_call.1} parent=1 // pred_check
      _
    $region19: #{tpu_custom_call.1} parent=1 // pred_check_branch
      %51 = sbr.rel (0) target = $region21
    $region20: #{tpu_custom_call.1} parent=1 // pred_region
      %52 = dma.done [#allocation3], 2048
    $region21: #{tpu_custom_call.1} parent=1 // pred_fallthru
      _
    // Predicated region
    $region22: #{tpu_custom_call.1} parent=1 // pred_check
      _
    $region23: #{tpu_custom_call.1} parent=1 // pred_check_branch
      %54 = sbr.rel (0) target = $region25
    $region24: #{tpu_custom_call.1} parent=1 // pred_region
      %55 = dma.done [#allocation6], 1024
    $region25: #{tpu_custom_call.1} parent=1 // pred_fallthru
      _
    // Predicated region
    $region26: #{tpu_custom_call.1} parent=1 // pred_check
      _
    $region27: #{tpu_custom_call.1} parent=1 // pred_check_branch
      %57 = sbr.rel (0) target = $region29
    $region28: #{tpu_custom_call.1} parent=1 // pred_region
      %58 = dma.done [#allocation6], 4096
    $region29: #{tpu_custom_call.1} parent=1 // pred_fallthru
      _
    %v60 = vld [vmem:[#allocation2] sm:$0xff]
    %v61 = vld [vmem:[#allocation2 + $0x8] sm:$0xff]
    %v62 = vld [vmem:[#allocation2 + $0x10] sm:$0xff]
    %v63 = vld [vmem:[#allocation2 + $0x18] sm:$0xff]
    %v64 = vld [vmem:[#allocation2 + $0x20] sm:$0xff]
    %v65 = vld [vmem:[#allocation2 + $0x28] sm:$0xff]
    %v66 = vld [vmem:[#allocation2 + $0x30] sm:$0xff]
    %v67 = vld [vmem:[#allocation2 + $0x38] sm:$0xff]
    %v68 = vld [vmem:[#allocation2 + $0x40] sm:$0xff]
    %v69 = vld [vmem:[#allocation2 + $0x48] sm:$0xff]
    %v70 = vld [vmem:[#allocation2 + $0x50] sm:$0xff]
    %v71 = vld [vmem:[#allocation2 + $0x58] sm:$0xff]
    %v72 = vld [vmem:[#allocation2 + $0x60] sm:$0xff]
    %v73 = vld [vmem:[#allocation2 + $0x68] sm:$0xff]
    %v74 = vld [vmem:[#allocation2 + $0x70] sm:$0xff]
    %v75 = vld [vmem:[#allocation2 + $0x78] sm:$0xff]
    %v76 = vpack.c.bf16 %v62, %v60
    %v77 = vpack.c.bf16 %v63, %v61
    %v78 = vpack.c.bf16 %v66, %v64
    %v79 = vpack.c.bf16 %v67, %v65
    %v80 = vpack.c.bf16 %v70, %v68
    %v81 = vpack.c.bf16 %v71, %v69
    %v82 = vpack.c.bf16 %v74, %v72
    %v83 = vpack.c.bf16 %v75, %v73
    %v84 = vld [vmem:[#allocation7] sm:$0xff]
    %v85 = vld [vmem:[#allocation7 + $0x8] sm:$0xff]
    %v86 = vld [vmem:[#allocation7 + $0x10] sm:$0xff]
    %v87 = vld [vmem:[#allocation7 + $0x18] sm:$0xff]
    %v88 = vld [vmem:[#allocation7 + $0x20] sm:$0xff]
    %v89 = vld [vmem:[#allocation7 + $0x28] sm:$0xff]
    %v90 = vld [vmem:[#allocation7 + $0x30] sm:$0xff]
    %v91 = vld [vmem:[#allocation7 + $0x38] sm:$0xff]
    %v92 = vld [vmem:[#allocation7 + $0x40] sm:$0xff]
    %v93 = vld [vmem:[#allocation7 + $0x48] sm:$0xff]
    %v94 = vld [vmem:[#allocation7 + $0x50] sm:$0xff]
    %v95 = vld [vmem:[#allocation7 + $0x58] sm:$0xff]
    %v96 = vld [vmem:[#allocation7 + $0x60] sm:$0xff]
    %v97 = vld [vmem:[#allocation7 + $0x68] sm:$0xff]
    %v98 = vld [vmem:[#allocation7 + $0x70] sm:$0xff]
    %v99 = vld [vmem:[#allocation7 + $0x78] sm:$0xff]
    %v100 = vld [vmem:[#allocation7 + $0x80] sm:$0xff]
    %v101 = vld [vmem:[#allocation7 + $0x88] sm:$0xff]
    %v102 = vld [vmem:[#allocation7 + $0x90] sm:$0xff]
    %v103 = vld [vmem:[#allocation7 + $0x98] sm:$0xff]
    %v104 = vld [vmem:[#allocation7 + $0xa0] sm:$0xff]
    %v105 = vld [vmem:[#allocation7 + $0xa8] sm:$0xff]
    %v106 = vld [vmem:[#allocation7 + $0xb0] sm:$0xff]
    %v107 = vld [vmem:[#allocation7 + $0xb8] sm:$0xff]
    %v108 = vld [vmem:[#allocation7 + $0xc0] sm:$0xff]
    %v109 = vld [vmem:[#allocation7 + $0xc8] sm:$0xff]
    %v110 = vld [vmem:[#allocation7 + $0xd0] sm:$0xff]
    %v111 = vld [vmem:[#allocation7 + $0xd8] sm:$0xff]
    %v112 = vld [vmem:[#allocation7 + $0xe0] sm:$0xff]
    %v113 = vld [vmem:[#allocation7 + $0xe8] sm:$0xff]
    %v114 = vld [vmem:[#allocation7 + $0xf0] sm:$0xff]
    %v115 = vld [vmem:[#allocation7 + $0xf8] sm:$0xff]
    %v116 = vpack.c.bf16 %v85, %v84
    %v117 = vpack.c.bf16 %v87, %v86
    %v118 = vpack.c.bf16 %v89, %v88
    %v119 = vpack.c.bf16 %v91, %v90
    %v120 = vpack.c.bf16 %v93, %v92
    %v121 = vpack.c.bf16 %v95, %v94
    %v122 = vpack.c.bf16 %v97, %v96
    %v123 = vpack.c.bf16 %v99, %v98
    %v124 = vpack.c.bf16 %v101, %v100
    %v125 = vpack.c.bf16 %v103, %v102
    %v126 = vpack.c.bf16 %v105, %v104
    %v127 = vpack.c.bf16 %v107, %v106
    %v128 = vpack.c.bf16 %v109, %v108
    %v129 = vpack.c.bf16 %v111, %v110
    %v130 = vpack.c.bf16 %v113, %v112
    %v131 = vpack.c.bf16 %v115, %v114
    %v132 = vld [vmem:[%s3] sm:$0x1]
    %v134 = vlaneseq
    %v135 = vshrl.u32 %v134, 7
    %v136 = vsub.s32 0, %v135
    %v137 = vrot.slane %v132, %v136
    %139 = vmatprep.subr.bf16.mxu0 0
    %140 = vmatpush1.bf16.msra.mxu0 %v116
    %141 = vmatprep.subr.bf16.mxu0 0
    %142 = vmatpush1.bf16.msra.mxu0 %v117
    %143 = vmatprep.subr.bf16.mxu0 0
    %144 = vmatpush1.bf16.msra.mxu0 %v118
    %145 = vmatprep.subr.bf16.mxu0 0
    %146 = vmatpush1.bf16.msra.mxu0 %v119
    %147 = vmatprep.subr.bf16.mxu0 0
    %148 = vmatpush1.bf16.msra.mxu0 %v120
    %149 = vmatprep.subr.bf16.mxu0 0
    %150 = vmatpush1.bf16.msra.mxu0 %v121
    %151 = vmatprep.subr.bf16.mxu0 0
    %152 = vmatpush1.bf16.msra.mxu0 %v122
    %153 = vmatprep.subr.bf16.mxu0 0
    %154 = vmatpush1.bf16.msra.mxu0 %v123
    %155 = vmatprep.subr.bf16.mxu0 0
    %156 = vmatpush1.bf16.msra.mxu0 %v124
    %157 = vmatprep.subr.bf16.mxu0 0
    %158 = vmatpush1.bf16.msra.mxu0 %v125
    %159 = vmatprep.subr.bf16.mxu0 0
    %160 = vmatpush1.bf16.msra.mxu0 %v126
    %161 = vmatprep.subr.bf16.mxu0 0
    %162 = vmatpush1.bf16.msra.mxu0 %v127
    %163 = vmatprep.subr.bf16.mxu0 0
    %164 = vmatpush1.bf16.msra.mxu0 %v128
    %165 = vmatprep.subr.bf16.mxu0 0
    %166 = vmatpush1.bf16.msra.mxu0 %v129
    %167 = vmatprep.subr.bf16.mxu0 0
    %168 = vmatpush1.bf16.msra.mxu0 %v130
    %169 = vmatprep.subr.bf16.mxu0 0
    %170 = vmatpush1.bf16.msra.mxu0 %v131
    %171 = vmatprep.mubr.bf16.mxu0 %v77
    %172 = vmatmul.mubr.bf16.gmra.mrb[0].mxu0 %v76
    %v173 = vpop.f32.mrb[0].mxu0
    %v174 = vadd.f32 %v137, %v173
    %v175 = vpop.f32.mrb[0].mxu0
    %v176 = vpop.f32.mrb[0].mxu0
    %v177 = vadd.f32 %v137, %v176
    %v178 = vpop.f32.mrb[0].mxu0
    %179 = vmatprep.mubr.bf16.mxu0 %v79
    %180 = vmatmul.mubr.bf16.gmra.mrb[0].mxu0 %v78
    %v181 = vpop.f32.mrb[0].mxu0
    %v182 = vadd.f32 %v137, %v181
    %v183 = vpop.f32.mrb[0].mxu0
    %v184 = vpop.f32.mrb[0].mxu0
    %v185 = vadd.f32 %v137, %v184
    %v186 = vpop.f32.mrb[0].mxu0
    %187 = vmatprep.mubr.bf16.mxu0 %v81
    %188 = vmatmul.mubr.bf16.gmra.mrb[0].mxu0 %v80
    %v189 = vpop.f32.mrb[0].mxu0
    %v190 = vadd.f32 %v137, %v189
    %v191 = vpop.f32.mrb[0].mxu0
    %v192 = vpop.f32.mrb[0].mxu0
    %v193 = vadd.f32 %v137, %v192
    %v194 = vpop.f32.mrb[0].mxu0
    %195 = vmatprep.mubr.bf16.mxu0 %v83
    %196 = vmatmul.mubr.bf16.gmra.mrb[0].mxu0 %v82
    %v197 = vpop.f32.mrb[0].mxu0
    %v198 = vadd.f32 %v137, %v197
    %v199 = vpop.f32.mrb[0].mxu0
    %v200 = vpop.f32.mrb[0].mxu0
    %v201 = vadd.f32 %v137, %v200
    %v202 = vpop.f32.mrb[0].mxu0
    %203 = vdwg.mxu0
    %v204 = vpack.c.bf16 %v177, %v174
    %v205 = vpack.c.bf16 %v185, %v182
    %v206 = vpack.c.bf16 %v193, %v190
    %v207 = vpack.c.bf16 %v201, %v198
    %v208 = vld [vmem:[#allocation5] sm:$0xff]
    %v209 = vld [vmem:[#allocation5 + $0x8] sm:$0xff]
    %v210 = vld [vmem:[#allocation5 + $0x10] sm:$0xff]
    %v211 = vld [vmem:[#allocation5 + $0x18] sm:$0xff]
    %v212 = vld [vmem:[#allocation5 + $0x20] sm:$0xff]
    %v213 = vld [vmem:[#allocation5 + $0x28] sm:$0xff]
    %v214 = vld [vmem:[#allocation5 + $0x30] sm:$0xff]
    %v215 = vld [vmem:[#allocation5 + $0x38] sm:$0xff]
    %v216 = vpack.c.bf16 %v209, %v208
    %v217 = vpack.c.bf16 %v211, %v210
    %v218 = vpack.c.bf16 %v213, %v212
    %v219 = vpack.c.bf16 %v215, %v214
    %vm220 = vcmask 130048
    %v222 = vsel %vm220, %v216, 0
    %224 = vmatprep.subr.bf16.mxu0 0
    %225 = vmatpush1.bf16.msra.mxu0 %v204
    %226 = vmatprep.subr.bf16.mxu0 0
    %227 = vmatpush1.bf16.msra.mxu0 0
    %228 = vmatprep.subr.bf16.mxu0 0
    %229 = vmatpush1.bf16.msra.mxu0 0
    %230 = vmatprep.subr.bf16.mxu0 0
    %231 = vmatpush1.bf16.msra.mxu0 0
    %232 = vmatprep.subr.bf16.mxu0 0
    %233 = vmatpush1.bf16.msra.mxu0 0
    %234 = vmatprep.subr.bf16.mxu0 0
    %235 = vmatpush1.bf16.msra.mxu0 0
    %236 = vmatprep.subr.bf16.mxu0 0
    %237 = vmatpush1.bf16.msra.mxu0 0
    %238 = vmatprep.subr.bf16.mxu0 0
    %239 = vmatpush1.bf16.msra.mxu0 0
    %240 = vmatprep.subr.bf16.mxu0 0
    %241 = vmatpush1.bf16.msra.mxu0 0
    %242 = vmatprep.subr.bf16.mxu0 0
    %243 = vmatpush1.bf16.msra.mxu0 0
    %244 = vmatprep.subr.bf16.mxu0 0
    %245 = vmatpush1.bf16.msra.mxu0 0
    %246 = vmatprep.subr.bf16.mxu0 0
    %247 = vmatpush1.bf16.msra.mxu0 0
    %248 = vmatprep.subr.bf16.mxu0 0
    %249 = vmatpush1.bf16.msra.mxu0 0
    %250 = vmatprep.subr.bf16.mxu0 0
    %251 = vmatpush1.bf16.msra.mxu0 0
    %252 = vmatprep.subr.bf16.mxu0 0
    %253 = vmatpush1.bf16.msra.mxu0 0
    %254 = vmatprep.subr.bf16.mxu0 0
    %255 = vmatpush1.bf16.msra.mxu0 0
    %256 = vmatprep.mubr.bf16.mxu0 0
    %257 = vmatmul.mubr.bf16.gmra.mrb[0].mxu0 %v222
    %v258 = vpop.f32.mrb[0].mxu0
    %v259 = vadd.f32 0.0, %v258
    %v260 = vpop.f32.mrb[0].mxu0
    %v261 = vpop.f32.mrb[0].mxu0
    %v262 = vadd.f32 0.0, %v261
    %v263 = vpop.f32.mrb[0].mxu0
    %264 = vdwg.mxu0
    %v266 = vsel %vm220, %v217, 0
    %268 = vmatprep.subr.bf16.mxu0 0
    %269 = vmatpush1.bf16.msra.mxu0 %v205
    %270 = vmatprep.subr.bf16.mxu0 0
    %271 = vmatpush1.bf16.msra.mxu0 0
    %272 = vmatprep.subr.bf16.mxu0 0
    %273 = vmatpush1.bf16.msra.mxu0 0
    %274 = vmatprep.subr.bf16.mxu0 0
    %275 = vmatpush1.bf16.msra.mxu0 0
    %276 = vmatprep.subr.bf16.mxu0 0
    %277 = vmatpush1.bf16.msra.mxu0 0
    %278 = vmatprep.subr.bf16.mxu0 0
    %279 = vmatpush1.bf16.msra.mxu0 0
    %280 = vmatprep.subr.bf16.mxu0 0
    %281 = vmatpush1.bf16.msra.mxu0 0
    %282 = vmatprep.subr.bf16.mxu0 0
    %283 = vmatpush1.bf16.msra.mxu0 0
    %284 = vmatprep.subr.bf16.mxu0 0
    %285 = vmatpush1.bf16.msra.mxu0 0
    %286 = vmatprep.subr.bf16.mxu0 0
    %287 = vmatpush1.bf16.msra.mxu0 0
    %288 = vmatprep.subr.bf16.mxu0 0
    %289 = vmatpush1.bf16.msra.mxu0 0
    %290 = vmatprep.subr.bf16.mxu0 0
    %291 = vmatpush1.bf16.msra.mxu0 0
    %292 = vmatprep.subr.bf16.mxu0 0
    %293 = vmatpush1.bf16.msra.mxu0 0
    %294 = vmatprep.subr.bf16.mxu0 0
    %295 = vmatpush1.bf16.msra.mxu0 0
    %296 = vmatprep.subr.bf16.mxu0 0
    %297 = vmatpush1.bf16.msra.mxu0 0
    %298 = vmatprep.subr.bf16.mxu0 0
    %299 = vmatpush1.bf16.msra.mxu0 0
    %300 = vmatprep.mubr.bf16.mxu0 0
    %301 = vmatmul.mubr.bf16.gmra.mrb[0].mxu0 %v266
    %v302 = vpop.f32.mrb[0].mxu0
    %v303 = vadd.f32 0.0, %v302
    %v304 = vpop.f32.mrb[0].mxu0
    %v305 = vpop.f32.mrb[0].mxu0
    %v306 = vadd.f32 0.0, %v305
    %v307 = vpop.f32.mrb[0].mxu0
    %308 = vdwg.mxu0
    %v310 = vsel %vm220, %v218, 0
    %312 = vmatprep.subr.bf16.mxu0 0
    %313 = vmatpush1.bf16.msra.mxu0 %v206
    %314 = vmatprep.subr.bf16.mxu0 0
    %315 = vmatpush1.bf16.msra.mxu0 0
    %316 = vmatprep.subr.bf16.mxu0 0
    %317 = vmatpush1.bf16.msra.mxu0 0
    %318 = vmatprep.subr.bf16.mxu0 0
    %319 = vmatpush1.bf16.msra.mxu0 0
    %320 = vmatprep.subr.bf16.mxu0 0
    %321 = vmatpush1.bf16.msra.mxu0 0
    %322 = vmatprep.subr.bf16.mxu0 0
    %323 = vmatpush1.bf16.msra.mxu0 0
    %324 = vmatprep.subr.bf16.mxu0 0
    %325 = vmatpush1.bf16.msra.mxu0 0
    %326 = vmatprep.subr.bf16.mxu0 0
    %327 = vmatpush1.bf16.msra.mxu0 0
    %328 = vmatprep.subr.bf16.mxu0 0
    %329 = vmatpush1.bf16.msra.mxu0 0
    %330 = vmatprep.subr.bf16.mxu0 0
    %331 = vmatpush1.bf16.msra.mxu0 0
    %332 = vmatprep.subr.bf16.mxu0 0
    %333 = vmatpush1.bf16.msra.mxu0 0
    %334 = vmatprep.subr.bf16.mxu0 0
    %335 = vmatpush1.bf16.msra.mxu0 0
    %336 = vmatprep.subr.bf16.mxu0 0
    %337 = vmatpush1.bf16.msra.mxu0 0
    %338 = vmatprep.subr.bf16.mxu0 0
    %339 = vmatpush1.bf16.msra.mxu0 0
    %340 = vmatprep.subr.bf16.mxu0 0
    %341 = vmatpush1.bf16.msra.mxu0 0
    %342 = vmatprep.subr.bf16.mxu0 0
    %343 = vmatpush1.bf16.msra.mxu0 0
    %344 = vmatprep.mubr.bf16.mxu0 0
    %345 = vmatmul.mubr.bf16.gmra.mrb[0].mxu0 %v310
    %v346 = vpop.f32.mrb[0].mxu0
    %v347 = vadd.f32 0.0, %v346
    %v348 = vpop.f32.mrb[0].mxu0
    %v349 = vpop.f32.mrb[0].mxu0
    %v350 = vadd.f32 0.0, %v349
    %v351 = vpop.f32.mrb[0].mxu0
    %352 = vdwg.mxu0
    %v354 = vsel %vm220, %v219, 0
    %356 = vmatprep.subr.bf16.mxu0 0
    %357 = vmatpush1.bf16.msra.mxu0 %v207
    %358 = vmatprep.subr.bf16.mxu0 0
    %359 = vmatpush1.bf16.msra.mxu0 0
    %360 = vmatprep.subr.bf16.mxu0 0
    %361 = vmatpush1.bf16.msra.mxu0 0
    %362 = vmatprep.subr.bf16.mxu0 0
    %363 = vmatpush1.bf16.msra.mxu0 0
    %364 = vmatprep.subr.bf16.mxu0 0
    %365 = vmatpush1.bf16.msra.mxu0 0
    %366 = vmatprep.subr.bf16.mxu0 0
    %367 = vmatpush1.bf16.msra.mxu0 0
    %368 = vmatprep.subr.bf16.mxu0 0
    %369 = vmatpush1.bf16.msra.mxu0 0
    %370 = vmatprep.subr.bf16.mxu0 0
    %371 = vmatpush1.bf16.msra.mxu0 0
    %372 = vmatprep.subr.bf16.mxu0 0
    %373 = vmatpush1.bf16.msra.mxu0 0
    %374 = vmatprep.subr.bf16.mxu0 0
    %375 = vmatpush1.bf16.msra.mxu0 0
    %376 = vmatprep.subr.bf16.mxu0 0
    %377 = vmatpush1.bf16.msra.mxu0 0
    %378 = vmatprep.subr.bf16.mxu0 0
    %379 = vmatpush1.bf16.msra.mxu0 0
    %380 = vmatprep.subr.bf16.mxu0 0
    %381 = vmatpush1.bf16.msra.mxu0 0
    %382 = vmatprep.subr.bf16.mxu0 0
    %383 = vmatpush1.bf16.msra.mxu0 0
    %384 = vmatprep.subr.bf16.mxu0 0
    %385 = vmatpush1.bf16.msra.mxu0 0
    %386 = vmatprep.subr.bf16.mxu0 0
    %387 = vmatpush1.bf16.msra.mxu0 0
    %388 = vmatprep.mubr.bf16.mxu0 0
    %389 = vmatmul.mubr.bf16.gmra.mrb[0].mxu0 %v354
    %v390 = vpop.f32.mrb[0].mxu0
    %v391 = vadd.f32 0.0, %v390
    %v392 = vpop.f32.mrb[0].mxu0
    %v393 = vpop.f32.mrb[0].mxu0
    %v394 = vadd.f32 0.0, %v393
    %v395 = vpop.f32.mrb[0].mxu0
    %396 = vdwg.mxu0
    %v397 = vmax.f32 %v259, 0.0
    %v398 = vmax.f32 %v262, 0.0
    %v399 = vmax.f32 %v303, 0.0
    %v400 = vmax.f32 %v306, 0.0
    %v401 = vmax.f32 %v347, 0.0
    %v402 = vmax.f32 %v350, 0.0
    %v403 = vmax.f32 %v391, 0.0
    %v404 = vmax.f32 %v394, 0.0
    %405 = vst [vmem:[#allocation8] sm:$0xff] %v397
    %406 = vst [vmem:[#allocation8 + $0x8] sm:$0xff] %v398
    %407 = vst [vmem:[#allocation8 + $0x10] sm:$0xff] %v399
    %408 = vst [vmem:[#allocation8 + $0x18] sm:$0xff] %v400
    %409 = vst [vmem:[#allocation8 + $0x20] sm:$0xff] %v401
    %410 = vst [vmem:[#allocation8 + $0x28] sm:$0xff] %v402
    %411 = vst [vmem:[#allocation8 + $0x30] sm:$0xff] %v403
    %412 = vst [vmem:[#allocation8 + $0x38] sm:$0xff] %v404
    // Predicated region
    $region30: #{tpu_custom_call.1} parent=1 // pred_check
      _
    $region31: #{tpu_custom_call.1} parent=1 // pred_check_branch
      %414 = sbr.rel (0) target = $region33
    $region32: #{tpu_custom_call.1} parent=1 // pred_region
      %s416 = ssub.s32 1024, 1024
      %417 = vsyncadd [#allocation4], %s416
      %s418 = sshll.u32 [#allocation8], 4
      %s419 = int_to_ptr.vmem [resolvable:$true] %s418
      %424 = dma.vmem_to_hbm [thread:$0]  %s419, 1024, %s4, [#allocation4], 128, 128, 8
    $region33: #{tpu_custom_call.1} parent=1 // pred_fallthru
      _
    // Predicated region
    $region34: #{tpu_custom_call.1} parent=1 // pred_check
      _
    $region35: #{tpu_custom_call.1} parent=1 // pred_check_branch
      %426 = sbr.rel (0) target = $region37
    $region36: #{tpu_custom_call.1} parent=1 // pred_region
      %427 = dma.done [#allocation4], 1024
    $region37: #{tpu_custom_call.1} parent=1 // pred_fallthru
      _
    %428 = vsyncpa [#allocation3], 1
    %429 = vsyncpa [#allocation6], 1
    %430 = vsyncpa [#allocation4], 1

</llo_original>
